<compile_context>
chip_gen: v6e
topology: v6e:2x2x1
jax: 0.10.0
libtpu: 0.0.40
codegen_flags: <defaults>
</compile_context>

<pallas_src>
import jax
import jax.numpy as jnp
from jax.experimental import pallas as pl
from jax.experimental.pallas import tpu as pltpu


def _cdiv(a, b):
    return -(-a // b)


def _round_up(v, m):
    return ((v + m - 1) // m) * m


def _device_kind():
    try:
        return jax.devices()[0].device_kind.lower()
    except Exception:
        return ""


def _bf16_native():
    # v6e / v7x have bf16-native VPU + EUP; keep f32 math on v4/v5/unknown chips.
    kind = _device_kind()
    return any(tok in kind for tok in ("v6", "v7", "7x"))


def _is_v7x():
    kind = _device_kind()
    return ("7x" in kind) or ("v7" in kind)


def _ptanh_kernel(x_ref, a_ref, b_ref, o_ref):
    a = a_ref[...]                      # (row_tile, 1) in the compute dtype
    b = b_ref[...]
    x = x_ref[...].astype(a.dtype)      # no-op cast when compute dtype == input dtype
    # jnp.tanh lowers to the single EUP tanh push; the two muls go to the VPU,
    # so the kernel stays DMA-bound.
    o_ref[...] = (jnp.tanh(x * a) * b).astype(o_ref.dtype)


def ptanh(x, a, b, *, target_block_bytes=None, force_kernel=False):
    """x: (N, C, H, W); a, b: (C, 1, 1). Returns tanh(x * a) * b, same shape/dtype as x."""
    N, C, H, W = x.shape
    NC, HW = N * C, H * W
    itemsize = jnp.dtype(x.dtype).itemsize
    sublane = {4: 8, 2: 16, 1: 32}.get(itemsize, 8)

    # Compute dtype: bf16 inputs stay in bf16 on bf16-native chips, else f32.
    if x.dtype == jnp.bfloat16 and _bf16_native():
        cdt = jnp.bfloat16
    else:
        cdt = jnp.float32

    total_bytes = NC * HW * itemsize

    # ---- tiny-tensor bypass: fixed pallas_call overhead dominates; let XLA fuse it.
    if not force_kernel and total_bytes < (1 << 20):
        a4 = jnp.reshape(a, (1, C, 1, 1)).astype(cdt)
        b4 = jnp.reshape(b, (1, C, 1, 1)).astype(cdt)
        return (jnp.tanh(x.astype(cdt) * a4) * b4).astype(x.dtype)

    if target_block_bytes is None:
        target_block_bytes = (8 << 20) if _is_v7x() else (4 << 20)

    # Per-channel params broadcast over batch -> one (NC, 1) column (row = n*C + c).
    a_col = jnp.broadcast_to(jnp.reshape(a, (1, C)).astype(cdt), (N, C)).reshape(NC, 1)
    b_col = jnp.broadcast_to(jnp.reshape(b, (1, C)).astype(cdt), (N, C)).reshape(NC, 1)
    x2 = x.reshape(NC, HW)

    # ---- lane (column) tile: full HW when it fits the budget, else a fixed
    # multiple-of-128 tile with a ragged (Pallas-masked) tail block.
    rows_cap = min(_round_up(NC, sublane), 1024)
    col_cap = target_block_bytes // (rows_cap * itemsize)
    col_cap = max(1024, min(32768, (col_cap // 128) * 128))
    col_tile = HW if HW <= col_cap else col_cap
    n_col = _cdiv(HW, col_tile)

    # ---- row (sublane) tile: fill the block-byte budget; ragged last row block if
    # NC isn't a tile multiple (Pallas masks the tail writes -> no host pad / slice).
    desired_rows = max(sublane, (target_block_bytes // (col_tile * itemsize)) // sublane * sublane)
    if desired_rows >= NC:
        row_tile = NC                                  # full dim -> always layout-legal
    else:
        n_r = _cdiv(NC, desired_rows)
        row_tile = _round_up(_cdiv(NC, n_r), sublane)  # balanced, sublane-aligned
    n_row = _cdiv(NC, row_tile)

    # ---- make sure a big single-block tensor still gives both v7x TensorCores work.
    if n_row * n_col == 1 and total_bytes >= (2 << 20):
        if NC >= 2 * sublane:
            row_tile = _round_up(_cdiv(NC, 2), sublane)
            n_row = _cdiv(NC, row_tile)
        elif HW >= 256:
            col_tile = _round_up(_cdiv(HW, 2), 128)
            n_col = _cdiv(HW, col_tile)

    # ---- VMEM budget: double-buffered x + out blocks, streamed params, margin.
    # Cap at 48 MiB so it also fits v7x's 64 MiB physical VMEM.
    block_bytes = row_tile * col_tile * itemsize
    param_bytes = 4 * row_tile * 128 * jnp.dtype(cdt).itemsize  # lane-padded, dbl-buffered a & b
    vmem_limit = int(min(max(4 * block_bytes + param_bytes + (2 << 20), 16 << 20), 48 << 20))

    out2 = pl.pallas_call(
        _ptanh_kernel,
        out_shape=jax.ShapeDtypeStruct((NC, HW), x.dtype),
        grid_spec=pltpu.PrefetchScalarGridSpec(
            num_scalar_prefetch=0,
            grid=(n_row, n_col),
            in_specs=[
                pl.BlockSpec((row_tile, col_tile), lambda i, j: (i, j)),
                pl.BlockSpec((row_tile, 1), lambda i, j: (i, 0)),
                pl.BlockSpec((row_tile, 1), lambda i, j: (i, 0)),
            ],
            out_specs=pl.BlockSpec((row_tile, col_tile), lambda i, j: (i, j)),
        ),
        compiler_params=pltpu.CompilerParams(
            dimension_semantics=("parallel", "parallel"),  # megacore can shard either axis
            vmem_limit_bytes=vmem_limit,
        ),
    )(x2, a_col, b_col)

    return out2.reshape(N, C, H, W)


if __name__ == "__main__":
    key = jax.random.PRNGKey(0)
    k1, k2, k3, k4 = jax.random.split(key, 4)

    def ref_ptanh(x, a, b):
        xf = x.astype(jnp.float32)
        C = a.shape[0]
        return jnp.tanh(xf * jnp.reshape(a, (1, C, 1, 1))) * jnp.reshape(b, (1, C, 1, 1))

    # 1) spec shape (2, 4, 16, 16), f32 -- force the Pallas path (single full-dim block).
    x1 = jax.random.normal(k1, (2, 4, 16, 16), dtype=jnp.float32)
    a1 = jnp.full((4, 1, 1), 1.7159, dtype=jnp.float32)
    b1 = jnp.full((4, 1, 1), 2.0 / 3.0, dtype=jnp.float32)
    o1 = jax.block_until_ready(ptanh(x1, a1, b1, force_kernel=True))
    assert o1.shape == x1.shape and o1.dtype == x1.dtype
    assert jnp.allclose(o1, ref_ptanh(x1, a1, b1), atol=1e-6, rtol=1e-6)

    # 2) ragged column tail: HW=10000 isn't a multiple of the 4096-lane tile (no host pad).
    x2 = jax.random.normal(k2, (2, 7, 100, 100), dtype=jnp.float32)
    a2 = jax.random.normal(k3, (7, 1, 1), dtype=jnp.float32)
    b2 = jax.random.normal(k4, (7, 1, 1), dtype=jnp.float32)
    o2 = jax.block_until_ready(ptanh(x2, a2, b2, force_kernel=True, target_block_bytes=256 * 1024))
    assert jnp.allclose(o2, ref_ptanh(x2, a2, b2), atol=1e-5, rtol=1e-5)

    # 3) ragged row tail: NC=21 isn't a multiple of the 16-row tile (no host pad / slice).
    x3 = jax.random.normal(k1, (3, 7, 64, 64), dtype=jnp.float32)
    a3 = jax.random.normal(k2, (7, 1, 1), dtype=jnp.float32)
    b3 = jax.random.normal(k3, (7, 1, 1), dtype=jnp.float32)
    o3 = jax.block_until_ready(ptanh(x3, a3, b3, force_kernel=True, target_block_bytes=64 * 1024))
    assert jnp.allclose(o3, ref_ptanh(x3, a3, b3), atol=1e-5, rtol=1e-5)

    # 4) bf16 input: bf16-native compute on v6e/v7x, f32 compute fallback elsewhere.
    x4 = jax.random.normal(k4, (2, 4, 32, 32), dtype=jnp.float32).astype(jnp.bfloat16)
    a4 = jnp.full((4, 1, 1), 1.7159, dtype=jnp.float32)
    b4 = jnp.full((4, 1, 1), 2.0 / 3.0, dtype=jnp.float32)
    o4 = jax.block_until_ready(ptanh(x4, a4, b4, force_kernel=True))
    assert o4.dtype == jnp.bfloat16
    assert jnp.allclose(o4.astype(jnp.float32), ref_ptanh(x4, a4, b4), atol=3e-2, rtol=3e-2)

    # 5) tiny-tensor bypass path (fused XLA elementwise, no pallas_call).
    o5 = jax.block_until_ready(ptanh(x1, a1, b1))
    assert jnp.allclose(o5, ref_ptanh(x1, a1, b1), atol=1e-6, rtol=1e-6)

    print("KERNEL_OK")
</pallas_src>

<mosaic_0001>
module attributes {stable_mosaic.version = 11 : i64} {
  func.func @_ptanh_kernel(%arg0: i32, %arg1: i32, %arg2: memref<8x256xf32, #tpu.memory_space<vmem>>, %arg3: memref<8x1xf32, #tpu.memory_space<vmem>>, %arg4: memref<8x1xf32, #tpu.memory_space<vmem>>, %arg5: memref<8x256xf32, #tpu.memory_space<vmem>>) attributes {dimension_semantics = [#tpu.dimension_semantics<parallel>, #tpu.dimension_semantics<parallel>], iteration_bounds = array<i64: 1, 1>, scalar_prefetch = 0 : i64, scratch_operands = 0 : i64, tpu.core_type = #tpu.core_type<tc>, window_params = [{transform_indices = @transform_0, window_bounds = array<i64: 8, 256>}, {transform_indices = @transform_1, window_bounds = array<i64: 8, 1>}, {transform_indices = @transform_2, window_bounds = array<i64: 8, 1>}, {transform_indices = @transform_3, window_bounds = array<i64: 8, 256>}]} {
    %c0 = arith.constant 0 : index
    %c0_0 = arith.constant 0 : index
    %0 = vector.load %arg3[%c0, %c0_0] : memref<8x1xf32, #tpu.memory_space<vmem>>, vector<8x1xf32>
    %c0_1 = arith.constant 0 : index
    %c0_2 = arith.constant 0 : index
    %1 = vector.load %arg4[%c0_1, %c0_2] : memref<8x1xf32, #tpu.memory_space<vmem>>, vector<8x1xf32>
    %c0_3 = arith.constant 0 : index
    %c0_4 = arith.constant 0 : index
    %2 = vector.load %arg2[%c0_3, %c0_4] : memref<8x256xf32, #tpu.memory_space<vmem>>, vector<8x256xf32>
    %3 = vector.broadcast %0 : vector<8x1xf32> to vector<8x256xf32>
    %4 = arith.mulf %2, %3 : vector<8x256xf32>
    %5 = math.tanh %4 : vector<8x256xf32>
    %6 = vector.broadcast %1 : vector<8x1xf32> to vector<8x256xf32>
    %7 = arith.mulf %5, %6 : vector<8x256xf32>
    %c0_5 = arith.constant 0 : index
    %c0_6 = arith.constant 0 : index
    %8 = vector.load %arg5[%c0_5, %c0_6] : memref<8x256xf32, #tpu.memory_space<vmem>>, vector<8x256xf32>
    tpu.vector_store %arg5[%c0_5, %c0_6], %7 {strides = array<i32>} : memref<8x256xf32, #tpu.memory_space<vmem>>, vector<8x256xf32>,
    return
  }
  func.func @transform_0(%arg0: i32, %arg1: i32) -> (i32, i32) {
    %c0_i32 = arith.constant 0 : i32
    return %arg0, %arg1 : i32, i32
  }
  func.func @transform_1(%arg0: i32, %arg1: i32) -> (i32, i32) {
    %c0_i32 = arith.constant 0 : i32
    %c0_i32_0 = arith.constant 0 : i32
    return %arg0, %c0_i32 : i32, i32
  }
  func.func @transform_2(%arg0: i32, %arg1: i32) -> (i32, i32) {
    %c0_i32 = arith.constant 0 : i32
    %c0_i32_0 = arith.constant 0 : i32
    return %arg0, %c0_i32 : i32, i32
  }
  func.func @transform_3(%arg0: i32, %arg1: i32) -> (i32, i32) {
    %c0_i32 = arith.constant 0 : i32
    return %arg0, %arg1 : i32, i32
  }
}

</mosaic_0001>

<llo_original>
// kernel: tpu_custom_call.1
$region0: #{tpu_custom_call.1}
  #allocation0 [shape = 'u32[]', space=smem, size = 0x4, offset = 0x4, fixed_abs, tag = 'smem constant byte address 0x4 - core index']
  #allocation1 [shape = 'u32[144,128]{1,0:T(1,128)}', space=vmem, size = 0x12000, scoped, tag = 'internal scratch']
  %s0 = inlined_call_operand.vmem [shape: f32[8,256], index: 0, kind: input, shape index: {}]
  %s1 = inlined_call_operand.vmem [shape: f32[8,1], index: 1, kind: input, shape index: {}]
  %s2 = inlined_call_operand.vmem [shape: f32[8,1], index: 2, kind: input, shape index: {}]
  %s3 = inlined_call_operand.hbm [shape: f32[8,256], index: 3, kind: output, shape index: {}]
  %s4 = sld [smem:[#allocation0]]
  $region22: #{tpu_custom_call.1} parent=0
    _
  %s6 = ssub.s32 1, %s4
  %s7 = scalar_select 0, %s6, %s4
  $region1: #{tpu_custom_call.1} parent=0
    #allocation2 [shape = 'u8[8192]{0}', space=vmem, size = 0x2000, scoped, tag = 'output window, operand 0, single buffered']
    #allocation3 [shape = 's32[1]{0}', space=sflag, size = 0x4, scoped, tag = 'scoped memory for tpu_custom_call.1']
    %8 = vsyncpa [#allocation3], 0
    // Predicated region
    $region2: #{tpu_custom_call.1} parent=1 // pred_check
      _
    $region3: #{tpu_custom_call.1} parent=1 // pred_check_branch
      %10 = sbr.rel (0) target = $region5
    $region4: #{tpu_custom_call.1} parent=1 // pred_region
      _
    $region5: #{tpu_custom_call.1} parent=1 // pred_fallthru
      _
    // Predicated region
    $region6: #{tpu_custom_call.1} parent=1 // pred_check
      _
    $region7: #{tpu_custom_call.1} parent=1 // pred_check_branch
      %12 = sbr.rel (0) target = $region9
    $region8: #{tpu_custom_call.1} parent=1 // pred_region
      _
    $region9: #{tpu_custom_call.1} parent=1 // pred_fallthru
      _
    // Predicated region
    $region10: #{tpu_custom_call.1} parent=1 // pred_check
      _
    $region11: #{tpu_custom_call.1} parent=1 // pred_check_branch
      %14 = sbr.rel (0) target = $region13
    $region12: #{tpu_custom_call.1} parent=1 // pred_region
      _
    $region13: #{tpu_custom_call.1} parent=1 // pred_fallthru
      _
    %v15 = vld [vmem:[%s1] sm:$0xff]
    %v16 = vld [vmem:[%s2] sm:$0xff]
    %v17 = vld [vmem:[%s0] sm:$0xff]
    %v18 = vld [vmem:[%s0 + $0x8] sm:$0xff]
    %20 = vset.pattern.permute.xlu0 0
    %21 = vperm.xlu0 %20, %v15
    %v22 = vpop.permute.xlu0 %21
    %v24 = vmul.f32 %v17, %v22
    %v25 = vmul.f32 %v18, %v22
    %v26 = vtanh.pop %v24
    %v27 = vtanh.pop %v25
    %29 = vset.pattern.permute.xlu0 0
    %30 = vperm.xlu0 %29, %v16
    %v31 = vpop.permute.xlu0 %30
    %v33 = vmul.f32 %v26, %v31
    %v34 = vmul.f32 %v27, %v31
    %35 = vst [vmem:[#allocation2] sm:$0xff] %v33
    %36 = vst [vmem:[#allocation2 + $0x8] sm:$0xff] %v34
    // Predicated region
    $region14: #{tpu_custom_call.1} parent=1 // pred_check
      _
    $region15: #{tpu_custom_call.1} parent=1 // pred_check_branch
      %38 = sbr.rel (0) target = $region17
    $region16: #{tpu_custom_call.1} parent=1 // pred_region
      %s40 = ssub.s32 256, 256
      %41 = vsyncadd [#allocation3], %s40
      %s43 = sshll.u32 [#allocation2], 4
      %s44 = int_to_ptr.vmem [resolvable:$true] %s43
      %46 = dma.vmem_to_hbm [thread:$0]  %s44, 256, %s3, [#allocation3]
    $region17: #{tpu_custom_call.1} parent=1 // pred_fallthru
      _
    // Predicated region
    $region18: #{tpu_custom_call.1} parent=1 // pred_check
      _
    $region19: #{tpu_custom_call.1} parent=1 // pred_check_branch
      %48 = sbr.rel (0) target = $region21
    $region20: #{tpu_custom_call.1} parent=1 // pred_region
      %49 = dma.done [#allocation3], 256
    $region21: #{tpu_custom_call.1} parent=1 // pred_fallthru
      _
    %50 = vsyncpa [#allocation3], 1

</llo_original>
